<compile_context>
chip_gen: v7x
topology: tpu7x:2x2x1
jax: 0.10.0
libtpu: 0.0.40
codegen_flags: <defaults>
</compile_context>

<pallas_src>
import functools

import jax
import jax.numpy as jnp
from jax import lax
from jax.experimental import pallas as pl
from jax.experimental.pallas import tpu as pltpu


def _attn_head_kernel(seed_ref, x_ref, wq_ref, wk_ref, wv_ref, o_ref, acc_ref, *,
                      scale: float, dropout_rate: float, training: bool,
                      key_tile: int):
    """One batch block: out = dropout(softmax_dim1(mask(q k^T * scale))) @ v."""
    Bblk, T, C = x_ref.shape
    Hd_pad = wq_ref.shape[1]
    tk = key_tile
    n_tiles = T // tk

    x = x_ref[...]                                     # (Bblk, T, C), native dtype
    x2d = x.reshape(Bblk * T, C)

    # Batched query projection: one (Bblk*T, C) x (C, Hd_pad) MXU pass with f32
    # accumulation; cast back so bf16 inputs keep the fast bf16 MXU path for
    # the score matmuls (no-op for f32 inputs).
    q = jnp.dot(x2d, wq_ref[...], preferred_element_type=jnp.float32)
    q = q.astype(x.dtype).reshape(Bblk, T, Hd_pad)

    acc_ref[...] = jnp.zeros_like(acc_ref)

    use_dropout = training and dropout_rate > 0.0
    if use_dropout:
        # Seed once per grid step; bits are drawn per key tile below.
        # TODO(synk): cannot bit-match torch's dropout RNG stream; eval mode
        # (identity) matches the PyTorch module exactly.
        pltpu.prng_seed(seed_ref[0] + pl.program_id(0))
        thresh = jnp.uint32(min(int(dropout_rate * (2 ** 32)), 2 ** 32 - 1))
        inv_keep = 1.0 / (1.0 - dropout_rate)

    # Static key-tile loop (trip count T // tk known at trace time) so the
    # causal skip can use static row offsets.
    for kt in range(n_tiles):
        k0 = kt * tk
        nq = T - k0        # query rows < k0 are fully masked for this key tile

        # Key/value projections for just this tile's rows of x.
        xk = x[:, k0:k0 + tk, :].reshape(Bblk * tk, C)
        k_t = jnp.dot(xk, wk_ref[...], preferred_element_type=jnp.float32)
        k_t = k_t.astype(x.dtype).reshape(Bblk, tk, Hd_pad)
        v_t = jnp.dot(xk, wv_ref[...], preferred_element_type=jnp.float32)
        v_t = v_t.astype(x.dtype).reshape(Bblk, tk, Hd_pad)

        q_sub = q[:, k0:, :]                           # (Bblk, nq, Hd_pad)

        # Scores for queries [k0, T) vs keys [k0, k0+tk), f32 accumulation.
        s = jnp.einsum('bqd,bkd->bqk', q_sub, k_t,
                       preferred_element_type=jnp.float32) * scale  # (Bblk,nq,tk)

        # Causal (tril) mask in local coordinates: global key k0+j <= global
        # query k0+i  <=>  j <= i.
        qi = lax.broadcasted_iota(jnp.int32, (nq, tk), 0)
        kj = lax.broadcasted_iota(jnp.int32, (nq, tk), 1)
        s = jnp.where((kj <= qi)[None, :, :], s, -jnp.inf)

        # NOTE: the reference module applies F.softmax(weights, dim=1), i.e.
        # over the QUERY axis (axis 1 here).  Every key column j has at least
        # one unmasked row (i == j), so the max is finite, and rows < k0 (not
        # computed) would contribute exp(-inf) == 0 -> tile is self-contained.
        m = jnp.max(s, axis=1, keepdims=True)          # (Bblk, 1, tk)
        e = jnp.exp(s - m)                             # masked entries -> 0
        inv = pl.reciprocal(jnp.sum(e, axis=1, keepdims=True), approx=True)

        if use_dropout:
            inv = inv * inv_keep                       # fold keep-scale into recip
            bits = pltpu.bitcast(pltpu.prng_random_bits((Bblk, nq, tk)),
                                 jnp.uint32)
            p = jnp.where(bits >= thresh, e * inv, 0.0)
        else:
            p = e * inv

        acc_ref[:, k0:, :] += jnp.einsum('bqk,bkd->bqd', p.astype(x.dtype), v_t,
                                         preferred_element_type=jnp.float32)

    o_ref[...] = acc_ref[...].astype(o_ref.dtype)


def _divisors_desc(n, cap):
    cap = max(1, min(n, cap))
    return [d for d in range(cap, 0, -1) if n % d == 0]


def causal_self_attention_head(x, wq, wk, wv, *, dropout_rate=0.0,
                               training=False, seed=0, block_size=None):
    """x: (B, T, C); wq/wk/wv: (C, channels_head) == transposed nn.Linear weights."""
    B, T, C = x.shape
    Hd = wq.shape[1]
    if block_size is None:
        block_size = T
    assert T == block_size, "module assumes sequence length == block_size"
    if training:
        assert dropout_rate < 1.0, "dropout_rate must be < 1.0 in training mode"
    scale = float(Hd) ** -0.5

    # Lane-dense head dimension: pad to a multiple of 128 with zero columns so
    # q/k/v tiles and the output block fill whole vreg lanes (unmasked vst).
    # TODO(synk): on v5e with Hd << 128 an unpadded (B, T, Hd) output may win
    # (less HBM writeback); benchmark both.
    # TODO(synk): for multi-head use, pack heads along the lane axis instead of
    # zero-padding a single small head.
    Hd_pad = ((Hd + 127) // 128) * 128
    if Hd_pad != Hd:
        padc = ((0, 0), (0, Hd_pad - Hd))
        wq_p, wk_p, wv_p = jnp.pad(wq, padc), jnp.pad(wk, padc), jnp.pad(wv, padc)
    else:
        wq_p, wk_p, wv_p = wq, wk, wv

    itemsize = jnp.dtype(x.dtype).itemsize

    # ---- tile sizing: conservative working-set budget that fits every
    # generation's VMEM (v7x: 64 MiB physical, 32 MiB default scoped). ----
    budget = 24 * 1024 * 1024

    def working_set(bblk, tk):
        x_blk = 2 * bblk * T * C * itemsize            # double-buffered input
        w_blk = 3 * 2 * C * Hd_pad * itemsize          # weights (double-buffered)
        q_blk = bblk * T * Hd_pad * itemsize
        acc = bblk * T * Hd_pad * 4
        out_blk = 2 * bblk * T * Hd_pad * itemsize
        score = 2 * bblk * T * tk * 4                  # s + e f32 temporaries
        kv = 2 * bblk * tk * Hd_pad * itemsize
        return x_blk + w_blk + q_blk + acc + out_blk + score + kv

    # Key tile: largest divisor of T (<= 512, >= min(T,128)) that fits budget.
    cand = [d for d in _divisors_desc(T, 512) if d >= min(T, 128)]
    if not cand:
        cand = _divisors_desc(T, 512)[:1]
    tk = cand[-1]
    for d in cand:
        if working_set(1, d) <= budget:
            tk = d
            break

    # Batch block: largest divisor of B that fits budget, preferring >= 2 grid
    # steps so both v7x TensorCores get work and the pipeline has depth.
    divisors_B = [d for d in range(1, B + 1) if B % d == 0]
    candidates = sorted(divisors_B,
                        key=lambda d: (B // d >= min(B, 2), d), reverse=True)
    bblk = 1
    for d in candidates:
        if working_set(d, tk) <= budget:
            bblk = d
            break
    nb = B // bblk

    vmem_limit = int(min(max(32 * 1024 * 1024, 2 * working_set(bblk, tk)),
                         60 * 1024 * 1024))

    seed_arr = jnp.array([seed], dtype=jnp.int32)
    kernel = functools.partial(_attn_head_kernel, scale=scale,
                               dropout_rate=float(dropout_rate),
                               training=bool(training), key_tile=tk)

    # Advisory cost: triangular (causal-skipped) score / p@v work.
    tri = (T * T + T * tk) // 2
    cost = pl.CostEstimate(
        flops=int(B * (6 * T * C * Hd_pad + 4 * tri * Hd_pad)),
        transcendentals=int(B * tri),
        bytes_accessed=int((B * T * C + 3 * C * Hd_pad + B * T * Hd_pad) * itemsize),
    )

    # TODO(synk): mark the three weight BlockSpecs pipeline_mode=pl.Buffered(1)
    # once single-buffered specs are supported end-to-end; their block index is
    # constant across the grid so they are only DMA'd once regardless.
    out = pl.pallas_call(
        kernel,
        out_shape=jax.ShapeDtypeStruct((B, T, Hd_pad), x.dtype),
        grid_spec=pltpu.PrefetchScalarGridSpec(
            num_scalar_prefetch=1,                      # dropout seed lives in SMEM
            grid=(nb,),                                 # batch blocks
            in_specs=[
                pl.BlockSpec((bblk, T, C), lambda b, s_ref: (b, 0, 0)),    # x
                pl.BlockSpec((C, Hd_pad), lambda b, s_ref: (0, 0)),        # Wq
                pl.BlockSpec((C, Hd_pad), lambda b, s_ref: (0, 0)),        # Wk
                pl.BlockSpec((C, Hd_pad), lambda b, s_ref: (0, 0)),        # Wv
            ],
            out_specs=pl.BlockSpec((bblk, T, Hd_pad), lambda b, s_ref: (b, 0, 0)),
            scratch_shapes=[pltpu.VMEM((bblk, T, Hd_pad), jnp.float32)],
        ),
        compiler_params=pltpu.CompilerParams(
            dimension_semantics=("parallel",),          # batch blocks shard across TCs
            vmem_limit_bytes=vmem_limit),
        cost_estimate=cost,
    )(seed_arr, x, wq_p, wk_p, wv_p)

    if Hd_pad != Hd:
        out = out[..., :Hd]
    return out


def init_attention_params(key, channels_embedding, channels_head):
    """nn.Linear(bias=False) init: U(-1/sqrt(fan_in), 1/sqrt(fan_in)), stored (in, out)."""
    kq, kk, kv = jax.random.split(key, 3)
    bound = 1.0 / jnp.sqrt(channels_embedding)
    shp = (channels_embedding, channels_head)
    wq = jax.random.uniform(kq, shp, jnp.float32, -bound, bound)
    wk = jax.random.uniform(kk, shp, jnp.float32, -bound, bound)
    wv = jax.random.uniform(kv, shp, jnp.float32, -bound, bound)
    return wq, wk, wv


def causal_self_attention_head_ref(x, wq, wk, wv):
    """Pure-JAX reference of the PyTorch forward (eval mode: dropout == identity)."""
    B, T, C = x.shape
    Hd = wq.shape[1]
    q = x @ wq
    k = x @ wk
    v = x @ wv
    w = jnp.einsum('btd,bsd->bts', q, k) * (float(Hd) ** -0.5)
    tril = jnp.tril(jnp.ones((T, T), dtype=w.dtype))
    w = jnp.where(tril == 0, -jnp.inf, w)
    w = jax.nn.softmax(w, axis=1)        # matches F.softmax(..., dim=1) in the module
    return w @ v


if __name__ == "__main__":
    key = jax.random.PRNGKey(0)
    k_params, k_x = jax.random.split(key)

    # block_size = seq = 8, channels_embedding = 32, channels_head = 16
    B, T, C, Hd = 2, 8, 32, 16
    dropout_rate = 0.1

    wq, wk, wv = init_attention_params(k_params, C, Hd)
    x = jax.random.normal(k_x, (B, T, C), dtype=jnp.float32)

    # Eval-mode forward (matches PyTorch module.eval() semantics exactly).
    out = causal_self_attention_head(x, wq, wk, wv,
                                     dropout_rate=dropout_rate,
                                     training=False, block_size=T)
    out = jax.block_until_ready(out)

    ref = causal_self_attention_head_ref(x, wq, wk, wv)
    assert out.shape == (B, T, Hd)
    # Tolerance covers the approximate-reciprocal softmax normalization.
    assert jnp.allclose(out, ref, atol=1e-2, rtol=1e-2), "mismatch vs reference"

    print("KERNEL_OK")
</pallas_src>

<mosaic_0001>
module attributes {stable_mosaic.version = 11 : i64} {
  func.func @_attn_head_kernel(%arg0: i32, %arg1: memref<1xi32, #tpu.memory_space<smem>>, %arg2: memref<1x8x32xf32, #tpu.memory_space<vmem>>, %arg3: memref<32x128xf32, #tpu.memory_space<vmem>>, %arg4: memref<32x128xf32, #tpu.memory_space<vmem>>, %arg5: memref<32x128xf32, #tpu.memory_space<vmem>>, %arg6: memref<1x8x128xf32, #tpu.memory_space<vmem>>, %arg7: memref<1x8x128xf32, #tpu.memory_space<vmem>>) attributes {dimension_semantics = [#tpu.dimension_semantics<parallel>], iteration_bounds = array<i64: 2>, scalar_prefetch = 1 : i64, scratch_operands = 1 : i64, tpu.core_type = #tpu.core_type<tc>, window_params = [{transform_indices = @transform_0, window_bounds = array<i64: 1, 8, 32>}, {pipeline_mode = #tpu.pipeline_mode<synchronous>, transform_indices = @transform_1, window_bounds = array<i64: 32, 128>}, {pipeline_mode = #tpu.pipeline_mode<synchronous>, transform_indices = @transform_2, window_bounds = array<i64: 32, 128>}, {pipeline_mode = #tpu.pipeline_mode<synchronous>, transform_indices = @transform_3, window_bounds = array<i64: 32, 128>}, {transform_indices = @transform_4, window_bounds = array<i64: 1, 8, 128>}]} {
    %c0 = arith.constant 0 : index
    %c0_0 = arith.constant 0 : index
    %c0_1 = arith.constant 0 : index
    %0 = vector.load %arg2[%c0, %c0_0, %c0_1] : memref<1x8x32xf32, #tpu.memory_space<vmem>>, vector<1x8x32xf32>
    %1 = vector.shape_cast %0 : vector<1x8x32xf32> to vector<8x32xf32>
    %c0_2 = arith.constant 0 : index
    %c0_3 = arith.constant 0 : index
    %2 = vector.load %arg3[%c0_2, %c0_3] : memref<32x128xf32, #tpu.memory_space<vmem>>, vector<32x128xf32>
    %cst = arith.constant dense<0.000000e+00> : vector<8x128xf32>
    %3 = tpu.matmul %1, %2, %cst {dimension_numbers = #tpu.dot_dimension_numbers<[1], [0], [0], [1], [0, 0, 1, 1], [], []>} : vector<8x32xf32>, vector<32x128xf32>, vector<8x128xf32> -> vector<8x128xf32>
    %4 = vector.shape_cast %3 : vector<8x128xf32> to vector<1x8x128xf32>
    %cst_4 = arith.constant 0.000000e+00 : f32
    %5 = vector.broadcast %cst_4 : f32 to vector<1x8x128xf32>
    %c0_5 = arith.constant 0 : index
    %c0_6 = arith.constant 0 : index
    %c0_7 = arith.constant 0 : index
    %6 = vector.load %arg7[%c0_5, %c0_6, %c0_7] : memref<1x8x128xf32, #tpu.memory_space<vmem>>, vector<1x8x128xf32>
    tpu.vector_store %arg7[%c0_5, %c0_6, %c0_7], %5 {strides = array<i32>} : memref<1x8x128xf32, #tpu.memory_space<vmem>>, vector<1x8x128xf32>,
    %7 = vector.shape_cast %0 : vector<1x8x32xf32> to vector<8x32xf32>
    %c0_8 = arith.constant 0 : index
    %c0_9 = arith.constant 0 : index
    %8 = vector.load %arg4[%c0_8, %c0_9] : memref<32x128xf32, #tpu.memory_space<vmem>>, vector<32x128xf32>
    %cst_10 = arith.constant dense<0.000000e+00> : vector<8x128xf32>
    %9 = tpu.matmul %7, %8, %cst_10 {dimension_numbers = #tpu.dot_dimension_numbers<[1], [0], [0], [1], [0, 0, 1, 1], [], []>} : vector<8x32xf32>, vector<32x128xf32>, vector<8x128xf32> -> vector<8x128xf32>
    %10 = vector.shape_cast %9 : vector<8x128xf32> to vector<1x8x128xf32>
    %c0_11 = arith.constant 0 : index
    %c0_12 = arith.constant 0 : index
    %11 = vector.load %arg5[%c0_11, %c0_12] : memref<32x128xf32, #tpu.memory_space<vmem>>, vector<32x128xf32>
    %cst_13 = arith.constant dense<0.000000e+00> : vector<8x128xf32>
    %12 = tpu.matmul %7, %11, %cst_13 {dimension_numbers = #tpu.dot_dimension_numbers<[1], [0], [0], [1], [0, 0, 1, 1], [], []>} : vector<8x32xf32>, vector<32x128xf32>, vector<8x128xf32> -> vector<8x128xf32>
    %13 = vector.shape_cast %12 : vector<8x128xf32> to vector<1x8x128xf32>
    "tpu.trace_start"() <{level = 10 : i32, message = "bqd,bkd->bqk"}> : () -> ()
    %cst_14 = arith.constant dense<0.000000e+00> : vector<1x8x8xf32>
    %14 = tpu.matmul %4, %10, %cst_14 {dimension_numbers = #tpu.dot_dimension_numbers<[2], [2], [1], [1], [0, 0, 0, 1, 1, 1], [0], [0]>} : vector<1x8x128xf32>, vector<1x8x128xf32>, vector<1x8x8xf32> -> vector<1x8x8xf32>
    "tpu.trace_stop"() : () -> ()
    %cst_15 = arith.constant 2.500000e-01 : f32
    %15 = vector.broadcast %cst_15 : f32 to vector<1x8x8xf32>
    %16 = arith.mulf %14, %15 : vector<1x8x8xf32>
    %17 = tpu.iota {dimensions = array<i32: 0>} : vector<8x8xi32>
    %18 = tpu.iota {dimensions = array<i32: 1>} : vector<8x8xi32>
    %19 = arith.cmpi sle, %18, %17 : vector<8x8xi32>
    %20 = vector.shape_cast %19 : vector<8x8xi1> to vector<1x8x8xi1>
    %cst_16 = arith.constant 0xFF800000 : f32
    %21 = vector.broadcast %cst_16 : f32 to vector<1x8x8xf32>
    %22 = arith.select %20, %16, %21 : vector<1x8x8xi1>, vector<1x8x8xf32>
    %cst_17 = arith.constant dense<0xFF800000> : vector<1x8xf32>
    %23 = vector.multi_reduction <maximumf>, %22, %cst_17 [1] : vector<1x8x8xf32> to vector<1x8xf32>
    %24 = vector.shape_cast %23 : vector<1x8xf32> to vector<1x1x8xf32>
    %25 = vector.broadcast %24 : vector<1x1x8xf32> to vector<1x8x8xf32>
    %26 = arith.subf %22, %25 : vector<1x8x8xf32>
    %27 = math.exp %26 : vector<1x8x8xf32>
    %cst_18 = arith.constant dense<0.000000e+00> : vector<1x8xf32>
    %28 = vector.multi_reduction <add>, %27, %cst_18 [1] : vector<1x8x8xf32> to vector<1x8xf32>
    %29 = vector.shape_cast %28 : vector<1x8xf32> to vector<1x1x8xf32>
    %30 = tpu.reciprocal %29 {approx = true} : vector<1x1x8xf32> -> vector<1x1x8xf32>
    %31 = vector.broadcast %30 : vector<1x1x8xf32> to vector<1x8x8xf32>
    %32 = arith.mulf %27, %31 : vector<1x8x8xf32>
    %c0_19 = arith.constant 0 : index
    %c0_20 = arith.constant 0 : index
    %c0_21 = arith.constant 0 : index
    %33 = vector.load %arg7[%c0_19, %c0_20, %c0_21] : memref<1x8x128xf32, #tpu.memory_space<vmem>>, vector<1x8x128xf32>
    "tpu.trace_start"() <{level = 10 : i32, message = "bqk,bkd->bqd"}> : () -> ()
    %cst_22 = arith.constant dense<0.000000e+00> : vector<1x8x128xf32>
    %34 = tpu.matmul %32, %13, %cst_22 {dimension_numbers = #tpu.dot_dimension_numbers<[2], [1], [1], [2], [0, 0, 0, 1, 1, 2], [0], [0]>} : vector<1x8x8xf32>, vector<1x8x128xf32>, vector<1x8x128xf32> -> vector<1x8x128xf32>
    "tpu.trace_stop"() : () -> ()
    %35 = arith.addf %33, %34 : vector<1x8x128xf32>
    %c0_23 = arith.constant 0 : index
    %c0_24 = arith.constant 0 : index
    %c0_25 = arith.constant 0 : index
    %36 = vector.load %arg7[%c0_23, %c0_24, %c0_25] : memref<1x8x128xf32, #tpu.memory_space<vmem>>, vector<1x8x128xf32>
    tpu.vector_store %arg7[%c0_23, %c0_24, %c0_25], %35 {strides = array<i32>} : memref<1x8x128xf32, #tpu.memory_space<vmem>>, vector<1x8x128xf32>,
    %c0_26 = arith.constant 0 : index
    %c0_27 = arith.constant 0 : index
    %c0_28 = arith.constant 0 : index
    %37 = vector.load %arg7[%c0_26, %c0_27, %c0_28] : memref<1x8x128xf32, #tpu.memory_space<vmem>>, vector<1x8x128xf32>
    %c0_29 = arith.constant 0 : index
    %c0_30 = arith.constant 0 : index
    %c0_31 = arith.constant 0 : index
    %38 = vector.load %arg6[%c0_29, %c0_30, %c0_31] : memref<1x8x128xf32, #tpu.memory_space<vmem>>, vector<1x8x128xf32>
    tpu.vector_store %arg6[%c0_29, %c0_30, %c0_31], %37 {strides = array<i32>} : memref<1x8x128xf32, #tpu.memory_space<vmem>>, vector<1x8x128xf32>,
    return
  }
  func.func @transform_0(%arg0: i32, %arg1: memref<1xi32, #tpu.memory_space<smem>>) -> (i32, i32, i32) {
    %c0_i32 = arith.constant 0 : i32
    %c0_i32_0 = arith.constant 0 : i32
    %c0_i32_1 = arith.constant 0 : i32
    return %arg0, %c0_i32, %c0_i32_0 : i32, i32, i32
  }
  func.func @transform_1(%arg0: i32, %arg1: memref<1xi32, #tpu.memory_space<smem>>) -> (i32, i32) {
    %c0_i32 = arith.constant 0 : i32
    %c0_i32_0 = arith.constant 0 : i32
    %c0_i32_1 = arith.constant 0 : i32
    return %c0_i32, %c0_i32_0 : i32, i32
  }
  func.func @transform_2(%arg0: i32, %arg1: memref<1xi32, #tpu.memory_space<smem>>) -> (i32, i32) {
    %c0_i32 = arith.constant 0 : i32
    %c0_i32_0 = arith.constant 0 : i32
    %c0_i32_1 = arith.constant 0 : i32
    return %c0_i32, %c0_i32_0 : i32, i32
  }
  func.func @transform_3(%arg0: i32, %arg1: memref<1xi32, #tpu.memory_space<smem>>) -> (i32, i32) {
    %c0_i32 = arith.constant 0 : i32
    %c0_i32_0 = arith.constant 0 : i32
    %c0_i32_1 = arith.constant 0 : i32
    return %c0_i32, %c0_i32_0 : i32, i32
  }
  func.func @transform_4(%arg0: i32, %arg1: memref<1xi32, #tpu.memory_space<smem>>) -> (i32, i32, i32) {
    %c0_i32 = arith.constant 0 : i32
    %c0_i32_0 = arith.constant 0 : i32
    %c0_i32_1 = arith.constant 0 : i32
    return %arg0, %c0_i32, %c0_i32_0 : i32, i32, i32
  }
}

</mosaic_0001>

<llo_original>
// kernel: tpu_custom_call.1
$region0: #{tpu_custom_call.1}
  #allocation0 [shape = 'u32[]', space=smem, size = 0x4, offset = 0x4, fixed_abs, tag = 'smem constant byte address 0x4 - core index']
  #allocation1 [shape = 'u32[144,128]{1,0:T(1,128)}', space=vmem, size = 0x12000, scoped, tag = 'internal scratch']
  #allocation2 [shape = 'f32[1,8,128]{2,1,0:T(8,128)}', space=vmem, size = 0x1000, scoped, tag = 'scratch operand']
  #allocation3 [shape = 's32[1]{0}', space=sflag, size = 0x4, scoped, tag = 'scoped memory for tpu_custom_call.1']
  #allocation4 [shape = 's32[1]{0:T(128)S(6)}', space=smem, size = 0x200, scoped, tag = 'prefetched SMEM operand 0']
  %s0 = inlined_call_operand.<no memory space> [shape: s32[1], index: 0, kind: input, shape index: {}]
  %s1 = inlined_call_operand.hbm [shape: f32[2,8,32], index: 1, kind: input, shape index: {}]
  %s2 = inlined_call_operand.hbm [shape: f32[32,128], index: 2, kind: input, shape index: {}]
  %s3 = inlined_call_operand.hbm [shape: f32[32,128], index: 3, kind: input, shape index: {}]
  %s4 = inlined_call_operand.hbm [shape: f32[32,128], index: 4, kind: input, shape index: {}]
  %s5 = inlined_call_operand.hbm [shape: f32[2,8,128], index: 5, kind: output, shape index: {}]
  %s6 = sld [smem:[#allocation0]]
  $region65: #{tpu_custom_call.1} parent=0
    _
  %s8 = ssub.s32 1, %s6
  %s9 = scalar_select 0, %s8, %s6
  %10 = sst [smem:[#allocation4]] %s0
  $region1: #{tpu_custom_call.1} parent=0
    #allocation5 [shape = 'u8[8192]{0}', space=vmem, size = 0x2000, scoped, tag = 'input window, operand 1']
    #allocation6 [shape = 's32[2]{0}', space=sflag, size = 0x8, scoped, tag = 'scoped memory for tpu_custom_call.1']
    #allocation7 [shape = 's32[2]{0}', space=sflag, size = 0x8, scoped, tag = 'scoped memory for tpu_custom_call.1']
    #allocation8 [shape = 'u8[16384]{0}', space=vmem, size = 0x4000, scoped, tag = 'input window, operand 2, single buffered']
    #allocation9 [shape = 's32[1]{0}', space=sflag, size = 0x4, scoped, tag = 'scoped memory for tpu_custom_call.1']
    #allocation10 [shape = 'u8[16384]{0}', space=vmem, size = 0x4000, scoped, tag = 'input window, operand 3, single buffered']
    #allocation11 [shape = 'u8[16384]{0}', space=vmem, size = 0x4000, scoped, tag = 'input window, operand 4, single buffered']
    #allocation12 [shape = 's32[1]{0}', space=sflag, size = 0x4, scoped, tag = 'scoped memory for tpu_custom_call.1']
    #allocation13 [shape = 'u8[8192]{0}', space=vmem, size = 0x2000, scoped, tag = 'output window, operand 0']
    %11 = vsyncpa [#allocation6], 0
    %s12 = scalar_lea.sflag [#allocation6], 1
    %13 = vsyncpa %s12, 0
    %14 = vsyncpa [#allocation9], 0
    %15 = vsyncpa [#allocation12], 0
    %16 = vsyncpa [#allocation7], 0
    %s17 = scalar_lea.sflag [#allocation7], 1
    %18 = vsyncpa %s17, 0
    loop: start=0, step=1, limit=4
    $region2: #{tpu_custom_call.1} parent=1 // loop_pre_header
      _
    $region3: #{tpu_custom_call.1} parent=1 // loop_header
      %s20 = sphi 0, %s24
      %p21 = scmp.ge.s32.totalorder %s20, 4
      %s30 = sphi 0, %s32
      %s33 = sphi 0, %s30
      %s34 = sphi 0, %s33
      %s50 = sphi 0, %s34
      %s54 = sphi 0, %s54
      %s56 = sphi 0, %s54
      %s57 = sphi 0, %s56
      %s71 = sphi 0, %s57
      %s75 = sphi 0, %s75
      %s77 = sphi 0, %s75
      %s78 = sphi 0, %s77
      %s92 = sphi 0, %s78
      %s96 = sphi 0, %s96
      %s98 = sphi 0, %s96
      %s99 = sphi 0, %s98
      %s113 = sphi 0, %s99
      %s119 = sphi 0, %s121
      %s122 = sphi 0, %s119
      %s123 = sphi 0, %s122
      %s139 = sphi 0, %s123
    $region4: #{tpu_custom_call.1} parent=1 // loop_header_branch
      %23 = sbr.rel (%p21) target = $region8
    $region5: #{tpu_custom_call.1} parent=1 // loop_body
      %s25 = ssub.s32 %s20, 1
      %s26 = ssub.s32 %s20, 2
      %s27 = sadd.s32 %s20, 1
      %s28 = ssub.s32 %s20, %s27
      %p29 = scmp.eq.s32.totalorder %s28, 0
      %s31 = sadd.s32 %s30, 1
      %s32 = scalar_select %p29, %s30, %s31
      %p35 = pneg %p29
      %p36 = scmp.eq.s32.totalorder %s20, 1
      %p37 = por %p35, %p36
      %p38 = scmp.ne.s32.totalorder %s30, %s33
      %p39 = scmp.eq.s32.totalorder %s20, 0
      %p40 = por %p38, %p39
      %p41 = scmp.ne.s32.totalorder %s30, %s33
      %p42 = scmp.eq.s32.totalorder %s25, 1
      %p43 = por %p41, %p42
      %p44 = scmp.ne.s32.totalorder %s33, %s34
      %p45 = scmp.eq.s32.totalorder %s25, 0
      %p46 = por %p44, %p45
      %p47 = scmp.ne.s32.totalorder %s33, %s34
      %p48 = scmp.eq.s32.totalorder %s26, 1
      %p49 = por %p47, %p48
      %p51 = scmp.ne.s32.totalorder %s34, %s50
      %p52 = scmp.eq.s32.totalorder %s26, 0
      %p53 = por %p51, %p52
      %s55 = sadd.s32 %s54, 1
      %p58 = scmp.eq.s32.totalorder %s20, 1
      %p59 = scmp.ne.s32.totalorder %s54, %s56
      %p60 = scmp.eq.s32.totalorder %s20, 0
      %p61 = por %p59, %p60
      %p62 = scmp.ne.s32.totalorder %s54, %s56
      %p63 = scmp.eq.s32.totalorder %s25, 1
      %p64 = por %p62, %p63
      %p65 = scmp.ne.s32.totalorder %s56, %s57
      %p66 = scmp.eq.s32.totalorder %s25, 0
      %p67 = por %p65, %p66
      %p68 = scmp.ne.s32.totalorder %s56, %s57
      %p69 = scmp.eq.s32.totalorder %s26, 1
      %p70 = por %p68, %p69
      %p72 = scmp.ne.s32.totalorder %s57, %s71
      %p73 = scmp.eq.s32.totalorder %s26, 0
      %p74 = por %p72, %p73
      %s76 = sadd.s32 %s75, 1
      %p79 = scmp.eq.s32.totalorder %s20, 1
      %p80 = scmp.ne.s32.totalorder %s75, %s77
      %p81 = scmp.eq.s32.totalorder %s20, 0
      %p82 = por %p80, %p81
      %p83 = scmp.ne.s32.totalorder %s75, %s77
      %p84 = scmp.eq.s32.totalorder %s25, 1
      %p85 = por %p83, %p84
      %p86 = scmp.ne.s32.totalorder %s77, %s78
      %p87 = scmp.eq.s32.totalorder %s25, 0
      %p88 = por %p86, %p87
      %p89 = scmp.ne.s32.totalorder %s77, %s78
      %p90 = scmp.eq.s32.totalorder %s26, 1
      %p91 = por %p89, %p90
      %p93 = scmp.ne.s32.totalorder %s78, %s92
      %p94 = scmp.eq.s32.totalorder %s26, 0
      %p95 = por %p93, %p94
      %s97 = sadd.s32 %s96, 1
      %p100 = scmp.eq.s32.totalorder %s20, 1
      %p101 = scmp.ne.s32.totalorder %s96, %s98
      %p102 = scmp.eq.s32.totalorder %s20, 0
      %p103 = por %p101, %p102
      %p104 = scmp.ne.s32.totalorder %s96, %s98
      %p105 = scmp.eq.s32.totalorder %s25, 1
      %p106 = por %p104, %p105
      %p107 = scmp.ne.s32.totalorder %s98, %s99
      %p108 = scmp.eq.s32.totalorder %s25, 0
      %p109 = por %p107, %p108
      %p110 = scmp.ne.s32.totalorder %s98, %s99
      %p111 = scmp.eq.s32.totalorder %s26, 1
      %p112 = por %p110, %p111
      %p114 = scmp.ne.s32.totalorder %s99, %s113
      %p115 = scmp.eq.s32.totalorder %s26, 0
      %p116 = por %p114, %p115
      %s117 = ssub.s32 %s20, %s27
      %p118 = scmp.eq.s32.totalorder %s117, 0
      %s120 = sadd.s32 %s119, 1
      %s121 = scalar_select %p118, %s119, %s120
      %p124 = pneg %p118
      %p125 = scmp.eq.s32.totalorder %s20, 1
      %p126 = por %p124, %p125
      %p127 = scmp.ne.s32.totalorder %s119, %s122
      %p128 = scmp.eq.s32.totalorder %s20, 0
      %p129 = por %p127, %p128
      %p130 = scmp.ne.s32.totalorder %s119, %s122
      %p131 = scmp.eq.s32.totalorder %s25, 1
      %p132 = por %p130, %p131
      %p133 = scmp.ne.s32.totalorder %s122, %s123
      %p134 = scmp.eq.s32.totalorder %s25, 0
      %p135 = por %p133, %p134
      %p136 = scmp.ne.s32.totalorder %s122, %s123
      %p137 = scmp.eq.s32.totalorder %s26, 1
      %p138 = por %p136, %p137
      %p140 = scmp.ne.s32.totalorder %s123, %s139
      %p141 = scmp.eq.s32.totalorder %s26, 0
      %p142 = por %p140, %p141
      %p143 = scmp.le.s32.totalorder 1, %s20
      %p144 = scmp.lt.s32.totalorder %s20, 3
      %p145 = pnand %p143, %p144
      %p146 = pneg %p145
      // Predicated region
      $region9: #{tpu_custom_call.1} parent=5 // pred_check
        _
      $region10: #{tpu_custom_call.1} parent=5 // pred_check_branch
        %148 = sbr.rel (%p145) target = $region12
      $region11: #{tpu_custom_call.1} parent=5 // pred_region
        %s149 = ssub.s32 %s20, 1
        // Predicated region
        $region13: #{tpu_custom_call.1} parent=11 // pred_check
          %p150 = pneg %p67
        $region14: #{tpu_custom_call.1} parent=11 // pred_check_branch
          %152 = sbr.rel (%p150) target = $region16
        $region15: #{tpu_custom_call.1} parent=11 // pred_region
          %s154 = ssub.s32 512, 512
          %155 = vsyncadd [#allocation9], %s154
          %s156 = sshll.u32 [#allocation8], 4
          %s157 = int_to_ptr.vmem [resolvable:$true] %s156
          %162 = dma.hbm_to_vmem [thread:$0]  %s2, 512, %s157, [#allocation9], 128, 128, 8
        $region16: #{tpu_custom_call.1} parent=11 // pred_fallthru
          _
        // Predicated region
        $region17: #{tpu_custom_call.1} parent=11 // pred_check
          %p163 = pneg %p88
        $region18: #{tpu_custom_call.1} parent=11 // pred_check_branch
          %165 = sbr.rel (%p163) target = $region20
        $region19: #{tpu_custom_call.1} parent=11 // pred_region
          %s167 = ssub.s32 512, 512
          %168 = vsyncadd [#allocation9], %s167
          %s169 = sshll.u32 [#allocation10], 4
          %s170 = int_to_ptr.vmem [resolvable:$true] %s169
          %175 = dma.hbm_to_vmem [thread:$0]  %s3, 512, %s170, [#allocation9], 128, 128, 8
        $region20: #{tpu_custom_call.1} parent=11 // pred_fallthru
          _
        // Predicated region
        $region21: #{tpu_custom_call.1} parent=11 // pred_check
          %p176 = pneg %p109
        $region22: #{tpu_custom_call.1} parent=11 // pred_check_branch
          %178 = sbr.rel (%p176) target = $region24
        $region23: #{tpu_custom_call.1} parent=11 // pred_region
          %s180 = ssub.s32 512, 512
          %181 = vsyncadd [#allocation12], %s180
          %s182 = sshll.u32 [#allocation11], 4
          %s183 = int_to_ptr.vmem [resolvable:$true] %s182
          %188 = dma.hbm_to_vmem [thread:$0]  %s4, 512, %s183, [#allocation12], 128, 128, 8
        $region24: #{tpu_custom_call.1} parent=11 // pred_fallthru
          _
      $region12: #{tpu_custom_call.1} parent=5 // pred_fallthru
        _
      %p189 = scmp.lt.s32.totalorder %s20, 2
      // Predicated region
      $region25: #{tpu_custom_call.1} parent=5 // pred_check
        %p190 = pneg %p189
      $region26: #{tpu_custom_call.1} parent=5 // pred_check_branch
        %192 = sbr.rel (%p190) target = $region28
      $region27: #{tpu_custom_call.1} parent=5 // pred_region
        // Predicated region
        $region29: #{tpu_custom_call.1} parent=27 // pred_check
          %p193 = pneg %p40
        $region30: #{tpu_custom_call.1} parent=27 // pred_check_branch
          %195 = sbr.rel (%p193) target = $region32
        $region31: #{tpu_custom_call.1} parent=27 // pred_region
          %s196 = sand.u32 %s30, 1
          %s197 = scalar_lea.sflag [#allocation6], %s196
          %s198 = sand.u32 %s30, 1
          %s199 = smul.addr %s198, 8
          %s200 = scalar_lea.vmem [#allocation5], %s199
          %s202 = ssub.s32 128, 128
          %203 = vsyncadd %s197, %s202
          %s204 = smul.addr %s20, 128
          %s205 = scalar_lea.hbm %s1, %s204
          %s207 = sshll.u32 %s200, 4
          %s208 = int_to_ptr.vmem [resolvable:$true] %s207
          %210 = dma.hbm_to_vmem [thread:$0]  %s205, 128, %s208, %s197
        $region32: #{tpu_custom_call.1} parent=27 // pred_fallthru
          _
      $region28: #{tpu_custom_call.1} parent=5 // pred_fallthru
        _
      %p211 = scmp.le.s32.totalorder 1, %s20
      %p212 = scmp.lt.s32.totalorder %s20, 3
      %p213 = pnand %p211, %p212
      %p214 = pneg %p213
      // Predicated region
      $region33: #{tpu_custom_call.1} parent=5 // pred_check
        _
      $region34: #{tpu_custom_call.1} parent=5 // pred_check_branch
        %216 = sbr.rel (%p213) target = $region36
      $region35: #{tpu_custom_call.1} parent=5 // pred_region
        %s217 = ssub.s32 %s20, 1
        %s218 = sand.u32 %s33, 1
        %s219 = scalar_lea.sflag [#allocation6], %s218
        %s220 = sand.u32 %s33, 1
        %s221 = smul.addr %s220, 8
        %s222 = scalar_lea.vmem [#allocation5], %s221
        // Predicated region
        $region37: #{tpu_custom_call.1} parent=35 // pred_check
          %p223 = pneg %p46
        $region38: #{tpu_custom_call.1} parent=35 // pred_check_branch
          %225 = sbr.rel (%p223) target = $region40
        $region39: #{tpu_custom_call.1} parent=35 // pred_region
          %226 = dma.done %s219, 128
        $region40: #{tpu_custom_call.1} parent=35 // pred_fallthru
          _
        // Predicated region
        $region41: #{tpu_custom_call.1} parent=35 // pred_check
          %p227 = pneg %p67
        $region42: #{tpu_custom_call.1} parent=35 // pred_check_branch
          %229 = sbr.rel (%p227) target = $region44
        $region43: #{tpu_custom_call.1} parent=35 // pred_region
          %230 = dma.done [#allocation9], 512
        $region44: #{tpu_custom_call.1} parent=35 // pred_fallthru
          _
        // Predicated region
        $region45: #{tpu_custom_call.1} parent=35 // pred_check
          %p231 = pneg %p88
        $region46: #{tpu_custom_call.1} parent=35 // pred_check_branch
          %233 = sbr.rel (%p231) target = $region48
        $region47: #{tpu_custom_call.1} parent=35 // pred_region
          %234 = dma.done [#allocation9], 512
        $region48: #{tpu_custom_call.1} parent=35 // pred_fallthru
          _
        // Predicated region
        $region49: #{tpu_custom_call.1} parent=35 // pred_check
          %p235 = pneg %p109
        $region50: #{tpu_custom_call.1} parent=35 // pred_check_branch
          %237 = sbr.rel (%p235) target = $region52
        $region51: #{tpu_custom_call.1} parent=35 // pred_region
          %238 = dma.done [#allocation12], 512
        $region52: #{tpu_custom_call.1} parent=35 // pred_fallthru
          _
        %s239 = sand.u32 %s33, 1
        %s240 = scalar_lea.sflag [#allocation6], %s239
        %s241 = sand.u32 %s33, 1
        %s242 = smul.addr %s241, 8
        %s243 = scalar_lea.vmem [#allocation5], %s242
        %p244 = pneg %p46
        %p245 = pneg %p43
        %p246 = pneg %p67
        %p247 = pneg %p64
        %p248 = pneg %p88
        %p249 = pneg %p85
        %p250 = pneg %p109
        %p251 = pneg %p106
        %p252 = pneg %p135
        %p253 = pneg %p132
        %s254 = sand.u32 %s122, 1
        %s255 = scalar_lea.sflag [#allocation7], %s254
        %s256 = sand.u32 %s122, 1
        %s257 = smul.addr %s256, 8
        %s258 = scalar_lea.vmem [#allocation13], %s257
        %v259 = vld [vmem:[%s222] sm:$0xff]
        %v260 = vld [vmem:[#allocation8] sm:$0xff]
        %v261 = vld [vmem:[#allocation8 + $0x8] sm:$0xff]
        %v262 = vld [vmem:[#allocation8 + $0x10] sm:$0xff]
        %v263 = vld [vmem:[#allocation8 + $0x18] sm:$0xff]
        %vm264 = vcmask 261120
        %v266 = vsel %vm264, %v259, 0
        %268 = vmatprep.subr.mxu0 0.0
        %269 = vmatpush1.msra.mxu0 %v260
        %270 = vmatprep.subr.mxu0 0.0
        %271 = vmatpush1.msra.mxu0 %v261
        %272 = vmatprep.subr.mxu0 0.0
        %273 = vmatpush1.msra.mxu0 %v262
        %274 = vmatprep.subr.mxu0 0.0
        %275 = vmatpush1.msra.mxu0 %v263
        %276 = vmatprep.subr.mxu0 0.0
        %277 = vmatpush1.msra.mxu0 0.0
        %278 = vmatprep.subr.mxu0 0.0
        %279 = vmatpush1.msra.mxu0 0.0
        %280 = vmatprep.subr.mxu0 0.0
        %281 = vmatpush1.msra.mxu0 0.0
        %282 = vmatprep.subr.mxu0 0.0
        %283 = vmatpush1.msra.mxu0 0.0
        %284 = vmatprep.subr.mxu0 0.0
        %285 = vmatpush1.msra.mxu0 0.0
        %286 = vmatprep.subr.mxu0 0.0
        %287 = vmatpush1.msra.mxu0 0.0
        %288 = vmatprep.subr.mxu0 0.0
        %289 = vmatpush1.msra.mxu0 0.0
        %290 = vmatprep.subr.mxu0 0.0
        %291 = vmatpush1.msra.mxu0 0.0
        %292 = vmatprep.subr.mxu0 0.0
        %293 = vmatpush1.msra.mxu0 0.0
        %294 = vmatprep.subr.mxu0 0.0
        %295 = vmatpush1.msra.mxu0 0.0
        %296 = vmatprep.subr.mxu0 0.0
        %297 = vmatpush1.msra.mxu0 0.0
        %298 = vmatprep.subr.mxu0 0.0
        %299 = vmatpush1.msra.mxu0 0.0
        %300 = vmatprep.subr.mxu0 0.0
        %301 = vmatpush1.msra.mxu0 0.0
        %302 = vmatprep.subr.mxu0 0.0
        %303 = vmatpush1.msra.mxu0 0.0
        %304 = vmatprep.subr.mxu0 0.0
        %305 = vmatpush1.msra.mxu0 0.0
        %306 = vmatprep.subr.mxu0 0.0
        %307 = vmatpush1.msra.mxu0 0.0
        %308 = vmatprep.subr.mxu0 0.0
        %309 = vmatpush1.msra.mxu0 0.0
        %310 = vmatprep.subr.mxu0 0.0
        %311 = vmatpush1.msra.mxu0 0.0
        %312 = vmatprep.subr.mxu0 0.0
        %313 = vmatpush1.msra.mxu0 0.0
        %314 = vmatprep.subr.mxu0 0.0
        %315 = vmatpush1.msra.mxu0 0.0
        %316 = vmatprep.subr.mxu0 0.0
        %317 = vmatpush1.msra.mxu0 0.0
        %318 = vmatprep.subr.mxu0 0.0
        %319 = vmatpush1.msra.mxu0 0.0
        %320 = vmatprep.subr.mxu0 0.0
        %321 = vmatpush1.msra.mxu0 0.0
        %322 = vmatprep.subr.mxu0 0.0
        %323 = vmatpush1.msra.mxu0 0.0
        %324 = vmatprep.subr.mxu0 0.0
        %325 = vmatpush1.msra.mxu0 0.0
        %326 = vmatprep.subr.mxu0 0.0
        %327 = vmatpush1.msra.mxu0 0.0
        %328 = vmatprep.subr.mxu0 0.0
        %329 = vmatpush1.msra.mxu0 0.0
        %330 = vmatprep.subr.mxu0 0.0
        %331 = vmatpush1.msra.mxu0 0.0
        %332 = vmatprep.mubr.f32.mxu0 0.0
        %333 = vmatmul.mubr.f32.gmra.mrb[0].mxu0 %v266
        %v334 = vpop.f32.mrb[0].mxu0
        %v335 = vadd.f32 0.0, %v334
        %v336 = vpop.f32.mrb[0].mxu0
        %337 = vdwg.mxu0
        %338 = vst [vmem:[#allocation2] sm:$0xff] 0.0
        %v339 = vld [vmem:[#allocation10] sm:$0xff]
        %v340 = vld [vmem:[#allocation10 + $0x8] sm:$0xff]
        %v341 = vld [vmem:[#allocation10 + $0x10] sm:$0xff]
        %v342 = vld [vmem:[#allocation10 + $0x18] sm:$0xff]
        %343 = vmatprep.subr.mxu0 0.0
        %344 = vmatpush1.msra.mxu0 %v339
        %345 = vmatprep.subr.mxu0 0.0
        %346 = vmatpush1.msra.mxu0 %v340
        %347 = vmatprep.subr.mxu0 0.0
        %348 = vmatpush1.msra.mxu0 %v341
        %349 = vmatprep.subr.mxu0 0.0
        %350 = vmatpush1.msra.mxu0 %v342
        %351 = vmatprep.subr.mxu0 0.0
        %352 = vmatpush1.msra.mxu0 0.0
        %353 = vmatprep.subr.mxu0 0.0
        %354 = vmatpush1.msra.mxu0 0.0
        %355 = vmatprep.subr.mxu0 0.0
        %356 = vmatpush1.msra.mxu0 0.0
        %357 = vmatprep.subr.mxu0 0.0
        %358 = vmatpush1.msra.mxu0 0.0
        %359 = vmatprep.subr.mxu0 0.0
        %360 = vmatpush1.msra.mxu0 0.0
        %361 = vmatprep.subr.mxu0 0.0
        %362 = vmatpush1.msra.mxu0 0.0
        %363 = vmatprep.subr.mxu0 0.0
        %364 = vmatpush1.msra.mxu0 0.0
        %365 = vmatprep.subr.mxu0 0.0
        %366 = vmatpush1.msra.mxu0 0.0
        %367 = vmatprep.subr.mxu0 0.0
        %368 = vmatpush1.msra.mxu0 0.0
        %369 = vmatprep.subr.mxu0 0.0
        %370 = vmatpush1.msra.mxu0 0.0
        %371 = vmatprep.subr.mxu0 0.0
        %372 = vmatpush1.msra.mxu0 0.0
        %373 = vmatprep.subr.mxu0 0.0
        %374 = vmatpush1.msra.mxu0 0.0
        %375 = vmatprep.subr.mxu0 0.0
        %376 = vmatpush1.msra.mxu0 0.0
        %377 = vmatprep.subr.mxu0 0.0
        %378 = vmatpush1.msra.mxu0 0.0
        %379 = vmatprep.subr.mxu0 0.0
        %380 = vmatpush1.msra.mxu0 0.0
        %381 = vmatprep.subr.mxu0 0.0
        %382 = vmatpush1.msra.mxu0 0.0
        %383 = vmatprep.subr.mxu0 0.0
        %384 = vmatpush1.msra.mxu0 0.0
        %385 = vmatprep.subr.mxu0 0.0
        %386 = vmatpush1.msra.mxu0 0.0
        %387 = vmatprep.subr.mxu0 0.0
        %388 = vmatpush1.msra.mxu0 0.0
        %389 = vmatprep.subr.mxu0 0.0
        %390 = vmatpush1.msra.mxu0 0.0
        %391 = vmatprep.subr.mxu0 0.0
        %392 = vmatpush1.msra.mxu0 0.0
        %393 = vmatprep.subr.mxu0 0.0
        %394 = vmatpush1.msra.mxu0 0.0
        %395 = vmatprep.subr.mxu0 0.0
        %396 = vmatpush1.msra.mxu0 0.0
        %397 = vmatprep.subr.mxu0 0.0
        %398 = vmatpush1.msra.mxu0 0.0
        %399 = vmatprep.subr.mxu0 0.0
        %400 = vmatpush1.msra.mxu0 0.0
        %401 = vmatprep.subr.mxu0 0.0
        %402 = vmatpush1.msra.mxu0 0.0
        %403 = vmatprep.subr.mxu0 0.0
        %404 = vmatpush1.msra.mxu0 0.0
        %405 = vmatprep.subr.mxu0 0.0
        %406 = vmatpush1.msra.mxu0 0.0
        %407 = vmatprep.mubr.f32.mxu0 0.0
        %408 = vmatmul.mubr.f32.gmra.mrb[0].mxu0 %v266
        %v409 = vpop.f32.mrb[0].mxu0
        %v410 = vadd.f32 0.0, %v409
        %v411 = vpop.f32.mrb[0].mxu0
        %412 = vdwg.mxu0
        %v413 = vld [vmem:[#allocation11] sm:$0xff]
        %v414 = vld [vmem:[#allocation11 + $0x8] sm:$0xff]
        %v415 = vld [vmem:[#allocation11 + $0x10] sm:$0xff]
        %v416 = vld [vmem:[#allocation11 + $0x18] sm:$0xff]
        %417 = vmatprep.subr.mxu0 0.0
        %418 = vmatpush1.msra.mxu0 %v413
        %419 = vmatprep.subr.mxu0 0.0
        %420 = vmatpush1.msra.mxu0 %v414
        %421 = vmatprep.subr.mxu0 0.0
        %422 = vmatpush1.msra.mxu0 %v415
        %423 = vmatprep.subr.mxu0 0.0
        %424 = vmatpush1.msra.mxu0 %v416
        %425 = vmatprep.subr.mxu0 0.0
        %426 = vmatpush1.msra.mxu0 0.0
        %427 = vmatprep.subr.mxu0 0.0
        %428 = vmatpush1.msra.mxu0 0.0
        %429 = vmatprep.subr.mxu0 0.0
        %430 = vmatpush1.msra.mxu0 0.0
        %431 = vmatprep.subr.mxu0 0.0
        %432 = vmatpush1.msra.mxu0 0.0
        %433 = vmatprep.subr.mxu0 0.0
        %434 = vmatpush1.msra.mxu0 0.0
        %435 = vmatprep.subr.mxu0 0.0
        %436 = vmatpush1.msra.mxu0 0.0
        %437 = vmatprep.subr.mxu0 0.0
        %438 = vmatpush1.msra.mxu0 0.0
        %439 = vmatprep.subr.mxu0 0.0
        %440 = vmatpush1.msra.mxu0 0.0
        %441 = vmatprep.subr.mxu0 0.0
        %442 = vmatpush1.msra.mxu0 0.0
        %443 = vmatprep.subr.mxu0 0.0
        %444 = vmatpush1.msra.mxu0 0.0
        %445 = vmatprep.subr.mxu0 0.0
        %446 = vmatpush1.msra.mxu0 0.0
        %447 = vmatprep.subr.mxu0 0.0
        %448 = vmatpush1.msra.mxu0 0.0
        %449 = vmatprep.subr.mxu0 0.0
        %450 = vmatpush1.msra.mxu0 0.0
        %451 = vmatprep.subr.mxu0 0.0
        %452 = vmatpush1.msra.mxu0 0.0
        %453 = vmatprep.subr.mxu0 0.0
        %454 = vmatpush1.msra.mxu0 0.0
        %455 = vmatprep.subr.mxu0 0.0
        %456 = vmatpush1.msra.mxu0 0.0
        %457 = vmatprep.subr.mxu0 0.0
        %458 = vmatpush1.msra.mxu0 0.0
        %459 = vmatprep.subr.mxu0 0.0
        %460 = vmatpush1.msra.mxu0 0.0
        %461 = vmatprep.subr.mxu0 0.0
        %462 = vmatpush1.msra.mxu0 0.0
        %463 = vmatprep.subr.mxu0 0.0
        %464 = vmatpush1.msra.mxu0 0.0
        %465 = vmatprep.subr.mxu0 0.0
        %466 = vmatpush1.msra.mxu0 0.0
        %467 = vmatprep.subr.mxu0 0.0
        %468 = vmatpush1.msra.mxu0 0.0
        %469 = vmatprep.subr.mxu0 0.0
        %470 = vmatpush1.msra.mxu0 0.0
        %471 = vmatprep.subr.mxu0 0.0
        %472 = vmatpush1.msra.mxu0 0.0
        %473 = vmatprep.subr.mxu0 0.0
        %474 = vmatpush1.msra.mxu0 0.0
        %475 = vmatprep.subr.mxu0 0.0
        %476 = vmatpush1.msra.mxu0 0.0
        %477 = vmatprep.subr.mxu0 0.0
        %478 = vmatpush1.msra.mxu0 0.0
        %479 = vmatprep.subr.mxu0 0.0
        %480 = vmatpush1.msra.mxu0 0.0
        %481 = vmatprep.mubr.f32.mxu0 0.0
        %482 = vmatmul.mubr.f32.gmra.mrb[0].mxu0 %v266
        %v483 = vpop.f32.mrb[0].mxu0
        %v484 = vadd.f32 0.0, %v483
        %v485 = vpop.f32.mrb[0].mxu0
        %486 = vdwg.mxu0
        %487 = vmatprep.subr.mxu0 0.0
        %488 = vmatpush1.xpose.msra.mxu0 %v410
        %489 = vmatprep.subr.mxu0 0.0
        %490 = vmatpush1.xpose.msra.mxu0 0.0
        %491 = vmatprep.subr.mxu0 0.0
        %492 = vmatpush1.xpose.msra.mxu0 0.0
        %493 = vmatprep.subr.mxu0 0.0
        %494 = vmatpush1.xpose.msra.mxu0 0.0
        %495 = vmatprep.subr.mxu0 0.0
        %496 = vmatpush1.xpose.msra.mxu0 0.0
        %497 = vmatprep.subr.mxu0 0.0
        %498 = vmatpush1.xpose.msra.mxu0 0.0
        %499 = vmatprep.subr.mxu0 0.0
        %500 = vmatpush1.xpose.msra.mxu0 0.0
        %501 = vmatprep.subr.mxu0 0.0
        %502 = vmatpush1.xpose.msra.mxu0 0.0
        %503 = vmatprep.subr.mxu0 0.0
        %504 = vmatpush1.xpose.msra.mxu0 0.0
        %505 = vmatprep.subr.mxu0 0.0
        %506 = vmatpush1.xpose.msra.mxu0 0.0
        %507 = vmatprep.subr.mxu0 0.0
        %508 = vmatpush1.xpose.msra.mxu0 0.0
        %509 = vmatprep.subr.mxu0 0.0
        %510 = vmatpush1.xpose.msra.mxu0 0.0
        %511 = vmatprep.subr.mxu0 0.0
        %512 = vmatpush1.xpose.msra.mxu0 0.0
        %513 = vmatprep.subr.mxu0 0.0
        %514 = vmatpush1.xpose.msra.mxu0 0.0
        %515 = vmatprep.subr.mxu0 0.0
        %516 = vmatpush1.xpose.msra.mxu0 0.0
        %517 = vmatprep.subr.mxu0 0.0
        %518 = vmatpush1.xpose.msra.mxu0 0.0
        %519 = vmatprep.subr.mxu0 0.0
        %520 = vmatpush1.xpose.msra.mxu0 0.0
        %521 = vmatprep.subr.mxu0 0.0
        %522 = vmatpush1.xpose.msra.mxu0 0.0
        %523 = vmatprep.subr.mxu0 0.0
        %524 = vmatpush1.xpose.msra.mxu0 0.0
        %525 = vmatprep.subr.mxu0 0.0
        %526 = vmatpush1.xpose.msra.mxu0 0.0
        %527 = vmatprep.subr.mxu0 0.0
        %528 = vmatpush1.xpose.msra.mxu0 0.0
        %529 = vmatprep.subr.mxu0 0.0
        %530 = vmatpush1.xpose.msra.mxu0 0.0
        %531 = vmatprep.subr.mxu0 0.0
        %532 = vmatpush1.xpose.msra.mxu0 0.0
        %533 = vmatprep.subr.mxu0 0.0
        %534 = vmatpush1.xpose.msra.mxu0 0.0
        %535 = vmatprep.subr.mxu0 0.0
        %536 = vmatpush1.xpose.msra.mxu0 0.0
        %537 = vmatprep.subr.mxu0 0.0
        %538 = vmatpush1.xpose.msra.mxu0 0.0
        %539 = vmatprep.subr.mxu0 0.0
        %540 = vmatpush1.xpose.msra.mxu0 0.0
        %541 = vmatprep.subr.mxu0 0.0
        %542 = vmatpush1.xpose.msra.mxu0 0.0
        %543 = vmatprep.subr.mxu0 0.0
        %544 = vmatpush1.xpose.msra.mxu0 0.0
        %545 = vmatprep.subr.mxu0 0.0
        %546 = vmatpush1.xpose.msra.mxu0 0.0
        %547 = vmatprep.subr.mxu0 0.0
        %548 = vmatpush1.xpose.msra.mxu0 0.0
        %549 = vmatprep.subr.mxu0 0.0
        %550 = vmatpush1.xpose.msra.mxu0 0.0
        %551 = vmatprep.mubr.f32.mxu0 0.0
        %552 = vmatmul.mubr.f32.gmra.mrb[0].mxu0 %v335
        %v553 = vpop.f32.mrb[0].mxu0
        %v554 = vadd.f32 0.0, %v553
        %v555 = vpop.f32.mrb[0].mxu0
        %556 = vdwg.mxu0
        %v557 = vmul.f32 %v554, 0.25
        %v558 = vlaneseq
        %v559 = vshrl.u32 %v558, 7
        %v560 = vlaneseq
        %v561 = vand.u32 %v560, 127
        %vm562 = vcmp.le.s32.totalorder %v561, %v559
        %v563 = vsel %vm562, %v557, -inf
        %vm564 = vcmask 64512
        %v565 = vsel %vm564, %v563, -inf
        %v566 = vrot.slane %v565, 4
        %v567 = vmax.f32 %v565, %v566
        %v568 = vrot.slane %v567, 2
        %v569 = vmax.f32 %v567, %v568
        %v570 = vrot.slane %v569, 1
        %v571 = vmax.f32 %v569, %v570
        %v572 = vsub.f32 %v563, %v571
        %v573 = vmul.f32 %v572, 1.442695
        %v574 = vpow.pop %v573
        %v575 = vsel %vm564, %v574, 0.0
        %v576 = vrot.slane %v575, 4
        %v577 = vadd.f32 %v575, %v576
        %v578 = vrot.slane %v577, 2
        %v579 = vadd.f32 %v577, %v578
        %v580 = vrot.slane %v579, 1
        %v581 = vadd.f32 %v579, %v580
        %v582 = vrcp.pop %v581
        %v583 = vmul.f32 %v574, %v582
        %v584 = vld [vmem:[#allocation2] sm:$0xff]
        %v586 = vsel %vm564, %v583, 0
        %588 = vmatprep.subr.mxu0 0.0
        %589 = vmatpush1.msra.mxu0 %v484
        %590 = vmatprep.subr.mxu0 0.0
        %591 = vmatpush1.msra.mxu0 0.0
        %592 = vmatprep.subr.mxu0 0.0
        %593 = vmatpush1.msra.mxu0 0.0
        %594 = vmatprep.subr.mxu0 0.0
        %595 = vmatpush1.msra.mxu0 0.0
        %596 = vmatprep.subr.mxu0 0.0
        %597 = vmatpush1.msra.mxu0 0.0
        %598 = vmatprep.subr.mxu0 0.0
        %599 = vmatpush1.msra.mxu0 0.0
        %600 = vmatprep.subr.mxu0 0.0
        %601 = vmatpush1.msra.mxu0 0.0
        %602 = vmatprep.subr.mxu0 0.0
        %603 = vmatpush1.msra.mxu0 0.0
        %604 = vmatprep.subr.mxu0 0.0
        %605 = vmatpush1.msra.mxu0 0.0
        %606 = vmatprep.subr.mxu0 0.0
        %607 = vmatpush1.msra.mxu0 0.0
        %608 = vmatprep.subr.mxu0 0.0
        %609 = vmatpush1.msra.mxu0 0.0
        %610 = vmatprep.subr.mxu0 0.0
        %611 = vmatpush1.msra.mxu0 0.0
        %612 = vmatprep.subr.mxu0 0.0
        %613 = vmatpush1.msra.mxu0 0.0
        %614 = vmatprep.subr.mxu0 0.0
        %615 = vmatpush1.msra.mxu0 0.0
        %616 = vmatprep.subr.mxu0 0.0
        %617 = vmatpush1.msra.mxu0 0.0
        %618 = vmatprep.subr.mxu0 0.0
        %619 = vmatpush1.msra.mxu0 0.0
        %620 = vmatprep.subr.mxu0 0.0
        %621 = vmatpush1.msra.mxu0 0.0
        %622 = vmatprep.subr.mxu0 0.0
        %623 = vmatpush1.msra.mxu0 0.0
        %624 = vmatprep.subr.mxu0 0.0
        %625 = vmatpush1.msra.mxu0 0.0
        %626 = vmatprep.subr.mxu0 0.0
        %627 = vmatpush1.msra.mxu0 0.0
        %628 = vmatprep.subr.mxu0 0.0
        %629 = vmatpush1.msra.mxu0 0.0
        %630 = vmatprep.subr.mxu0 0.0
        %631 = vmatpush1.msra.mxu0 0.0
        %632 = vmatprep.subr.mxu0 0.0
        %633 = vmatpush1.msra.mxu0 0.0
        %634 = vmatprep.subr.mxu0 0.0
        %635 = vmatpush1.msra.mxu0 0.0
        %636 = vmatprep.subr.mxu0 0.0
        %637 = vmatpush1.msra.mxu0 0.0
        %638 = vmatprep.subr.mxu0 0.0
        %639 = vmatpush1.msra.mxu0 0.0
        %640 = vmatprep.subr.mxu0 0.0
        %641 = vmatpush1.msra.mxu0 0.0
        %642 = vmatprep.subr.mxu0 0.0
        %643 = vmatpush1.msra.mxu0 0.0
        %644 = vmatprep.subr.mxu0 0.0
        %645 = vmatpush1.msra.mxu0 0.0
        %646 = vmatprep.subr.mxu0 0.0
        %647 = vmatpush1.msra.mxu0 0.0
        %648 = vmatprep.subr.mxu0 0.0
        %649 = vmatpush1.msra.mxu0 0.0
        %650 = vmatprep.subr.mxu0 0.0
        %651 = vmatpush1.msra.mxu0 0.0
        %652 = vmatprep.mubr.f32.mxu0 0.0
        %653 = vmatmul.mubr.f32.gmra.mrb[0].mxu0 %v586
        %v654 = vpop.f32.mrb[0].mxu0
        %v655 = vadd.f32 0.0, %v654
        %v656 = vpop.f32.mrb[0].mxu0
        %657 = vdwg.mxu0
        %v658 = vadd.f32 %v584, %v655
        %659 = vst [vmem:[#allocation2] sm:$0xff] %v658
        %v660 = vld [vmem:[#allocation2] sm:$0xff]
        %661 = vst [vmem:[%s258] sm:$0xff] %v660
        %s662 = sand.u32 %s122, 1
        %s663 = scalar_lea.sflag [#allocation7], %s662
        %s664 = sand.u32 %s122, 1
        %s665 = smul.addr %s664, 8
        %s666 = scalar_lea.vmem [#allocation13], %s665
        // Predicated region
        $region53: #{tpu_custom_call.1} parent=35 // pred_check
          %p667 = pneg %p132
        $region54: #{tpu_custom_call.1} parent=35 // pred_check_branch
          %669 = sbr.rel (%p667) target = $region56
        $region55: #{tpu_custom_call.1} parent=35 // pred_region
          %s671 = ssub.s32 128, 128
          %672 = vsyncadd %s663, %s671
          %s673 = smul.addr %s25, 128
          %s674 = scalar_lea.hbm %s5, %s673
          %s676 = sshll.u32 %s666, 4
          %s677 = int_to_ptr.vmem [resolvable:$true] %s676
          %679 = dma.vmem_to_hbm [thread:$0]  %s677, 128, %s674, %s663
        $region56: #{tpu_custom_call.1} parent=35 // pred_fallthru
          _
      $region36: #{tpu_custom_call.1} parent=5 // pred_fallthru
        _
      %p680 = scmp.le.s32.totalorder 2, %s20
      // Predicated region
      $region57: #{tpu_custom_call.1} parent=5 // pred_check
        %p681 = pneg %p680
      $region58: #{tpu_custom_call.1} parent=5 // pred_check_branch
        %683 = sbr.rel (%p681) target = $region60
      $region59: #{tpu_custom_call.1} parent=5 // pred_region
        %s684 = ssub.s32 %s20, 2
        // Predicated region
        $region61: #{tpu_custom_call.1} parent=59 // pred_check
          %p685 = pneg %p138
        $region62: #{tpu_custom_call.1} parent=59 // pred_check_branch
          %687 = sbr.rel (%p685) target = $region64
        $region63: #{tpu_custom_call.1} parent=59 // pred_region
          %s688 = sand.u32 %s123, 1
          %s689 = scalar_lea.sflag [#allocation7], %s688
          %s690 = sand.u32 %s123, 1
          %s691 = smul.addr %s690, 8
          %s692 = scalar_lea.vmem [#allocation13], %s691
          %693 = dma.done %s689, 128
        $region64: #{tpu_custom_call.1} parent=59 // pred_fallthru
          _
      $region60: #{tpu_custom_call.1} parent=5 // pred_fallthru
        _
    $region6: #{tpu_custom_call.1} parent=1 // loop_footer
      %s24 = sadd.s32 1, %s20
    $region7: #{tpu_custom_call.1} parent=1 // loop_footer_branch
      %19 = sbr.rel target = $region3
    $region8: #{tpu_custom_call.1} parent=1 // loop_exit
      _
    %694 = vsyncpa [#allocation6], 1
    %s695 = scalar_lea.sflag [#allocation6], 1
    %696 = vsyncpa %s695, 1
    %697 = vsyncpa [#allocation9], 1
    %698 = vsyncpa [#allocation12], 1
    %699 = vsyncpa [#allocation7], 1
    %s700 = scalar_lea.sflag [#allocation7], 1
    %701 = vsyncpa %s700, 1

</llo_original>
